<compile_context>
chip_gen: v7x
topology: tpu7x:2x2x1
jax: 0.10.0
libtpu: 0.0.40
codegen_flags: <defaults>
</compile_context>

<pallas_src>
import functools

import jax
import jax.numpy as jnp
from jax.experimental import pallas as pl
from jax.experimental.pallas import tpu as pltpu

_LANES = 128          # lane width: last dim of the kernel view
_MAX_ROW_TILE = 1024  # 1024 x 128 x 4B = 512 KiB per f32 tile (multiple of 8)


def _temp_tc_kernel(x_ref, o_ref, *, inv_temp, tanh_constant):
    """Elementwise hot path on a lane-dense (rows, 128) tile.

    inv_temp / tanh_constant are compile-time Python floats (or None).
    """
    x = x_ref[...].astype(jnp.float32)
    if inv_temp is not None:
        # logits /= temperature  (reciprocal folded at compile time)
        x = x * inv_temp
    if tanh_constant is not None:
        # logits = tanh_constant * tanh(logits)   (tanh runs on the EUP)
        x = tanh_constant * jnp.tanh(x)
    o_ref[...] = x.astype(o_ref.dtype)


def temp_and_tc(logits, temperature=None, tanh_constant=None):
    """JAX wrapper mirroring TempAndTC.forward."""
    use_temp = temperature is not None
    use_tc = tanh_constant is not None
    if not use_temp and not use_tc:
        return logits  # identity: no kernel launch

    inv_temp = float(1.0 / temperature) if use_temp else None
    tc = float(tanh_constant) if use_tc else None

    orig_shape = logits.shape
    orig_dtype = logits.dtype
    n = int(logits.size)

    # Lane-dense view: flatten -> pad -> (rows, 128).
    rows = pl.cdiv(n, _LANES)
    if rows <= _MAX_ROW_TILE:
        row_tile = rows          # single block == full array (exempt from /8 rule)
        grid_rows = 1
    else:
        row_tile = _MAX_ROW_TILE
        grid_rows = pl.cdiv(rows, row_tile)
    padded_rows = grid_rows * row_tile
    padded_n = padded_rows * _LANES

    flat = logits.reshape(-1)
    if padded_n != n:
        flat = jnp.pad(flat, (0, padded_n - n))
    x2d = flat.reshape(padded_rows, _LANES)

    kernel = functools.partial(_temp_tc_kernel, inv_temp=inv_temp, tanh_constant=tc)

    out2d = pl.pallas_call(
        kernel,
        out_shape=jax.ShapeDtypeStruct((padded_rows, _LANES), orig_dtype),
        grid=(grid_rows,),
        in_specs=[pl.BlockSpec((row_tile, _LANES), lambda i: (i, 0))],
        out_specs=pl.BlockSpec((row_tile, _LANES), lambda i: (i, 0)),
        compiler_params=pltpu.CompilerParams(dimension_semantics=("parallel",)),
    )(x2d)

    out = out2d.reshape(-1)
    if padded_n != n:
        out = out[:n]
    return out.reshape(orig_shape)


if __name__ == "__main__":
    key = jax.random.PRNGKey(0)

    # Controller-style logits: (batch=8, num_branches=32), f32.
    logits = jax.random.normal(key, (8, 32), dtype=jnp.float32)

    temperature = 5.0
    tanh_constant = 2.5

    out = jax.block_until_ready(
        temp_and_tc(logits, temperature=temperature, tanh_constant=tanh_constant)
    )

    # Reference (pure JAX) mirroring the PyTorch forward.
    ref = tanh_constant * jnp.tanh(logits / temperature)
    assert out.shape == logits.shape and out.dtype == logits.dtype
    assert jnp.allclose(out, ref, atol=1e-5, rtol=1e-5)

    # Optional-argument branches.
    out_t = jax.block_until_ready(temp_and_tc(logits, temperature=temperature))
    assert jnp.allclose(out_t, logits / temperature, atol=1e-5, rtol=1e-5)

    out_c = jax.block_until_ready(temp_and_tc(logits, tanh_constant=tanh_constant))
    assert jnp.allclose(out_c, tanh_constant * jnp.tanh(logits), atol=1e-5, rtol=1e-5)

    out_n = temp_and_tc(logits)  # both None -> identity, no kernel launch
    assert jnp.allclose(out_n, logits)

    # Larger input to exercise the tiled (multi-block, "parallel" grid) path:
    # 512*512 = 262144 elems -> 2048 lane-rows -> 2 tiles of 1024 rows.
    big = jax.random.normal(jax.random.PRNGKey(1), (512, 512), dtype=jnp.float32)
    out_big = jax.block_until_ready(
        temp_and_tc(big, temperature=temperature, tanh_constant=tanh_constant)
    )
    ref_big = tanh_constant * jnp.tanh(big / temperature)
    assert jnp.allclose(out_big, ref_big, atol=1e-5, rtol=1e-5)

    print("KERNEL_OK")
</pallas_src>

<mosaic_0001>
module attributes {stable_mosaic.version = 11 : i64} {
  func.func @_temp_tc_kernel(%arg0: i32, %arg1: memref<2x128xf32, #tpu.memory_space<vmem>>, %arg2: memref<2x128xf32, #tpu.memory_space<vmem>>) attributes {dimension_semantics = [#tpu.dimension_semantics<parallel>], iteration_bounds = array<i64: 1>, scalar_prefetch = 0 : i64, scratch_operands = 0 : i64, tpu.core_type = #tpu.core_type<tc>, window_params = [{transform_indices = @transform_0, window_bounds = array<i64: 2, 128>}, {transform_indices = @transform_1, window_bounds = array<i64: 2, 128>}]} {
    %c0 = arith.constant 0 : index
    %c0_0 = arith.constant 0 : index
    %0 = vector.load %arg1[%c0, %c0_0] : memref<2x128xf32, #tpu.memory_space<vmem>>, vector<2x128xf32>
    %cst = arith.constant 2.000000e-01 : f32
    %1 = vector.broadcast %cst : f32 to vector<2x128xf32>
    %2 = arith.mulf %0, %1 : vector<2x128xf32>
    %3 = math.tanh %2 : vector<2x128xf32>
    %cst_1 = arith.constant 2.500000e+00 : f32
    %4 = vector.broadcast %cst_1 : f32 to vector<2x128xf32>
    %5 = arith.mulf %4, %3 : vector<2x128xf32>
    %c0_2 = arith.constant 0 : index
    %c0_3 = arith.constant 0 : index
    %6 = vector.load %arg2[%c0_2, %c0_3] : memref<2x128xf32, #tpu.memory_space<vmem>>, vector<2x128xf32>
    tpu.vector_store %arg2[%c0_2, %c0_3], %5 {strides = array<i32>} : memref<2x128xf32, #tpu.memory_space<vmem>>, vector<2x128xf32>,
    return
  }
  func.func @transform_0(%arg0: i32) -> (i32, i32) {
    %c0_i32 = arith.constant 0 : i32
    %c0_i32_0 = arith.constant 0 : i32
    return %arg0, %c0_i32 : i32, i32
  }
  func.func @transform_1(%arg0: i32) -> (i32, i32) {
    %c0_i32 = arith.constant 0 : i32
    %c0_i32_0 = arith.constant 0 : i32
    return %arg0, %c0_i32 : i32, i32
  }
}

</mosaic_0001>

<llo_original>
// kernel: tpu_custom_call.1
$region0: #{tpu_custom_call.1}
  #allocation0 [shape = 'u32[]', space=smem, size = 0x4, offset = 0x4, fixed_abs, tag = 'smem constant byte address 0x4 - core index']
  #allocation1 [shape = 'u32[144,128]{1,0:T(1,128)}', space=vmem, size = 0x12000, scoped, tag = 'internal scratch']
  %s0 = inlined_call_operand.hbm [shape: f32[2,128], index: 0, kind: input, shape index: {}]
  %s1 = inlined_call_operand.hbm [shape: f32[2,128], index: 1, kind: output, shape index: {}]
  %s2 = sld [smem:[#allocation0]]
  $region18: #{tpu_custom_call.1} parent=0
    _
  %s4 = ssub.s32 1, %s2
  %s5 = scalar_select 0, %s4, %s2
  $region1: #{tpu_custom_call.1} parent=0
    #allocation2 [shape = 'u8[1024]{0}', space=vmem, size = 0x400, scoped, tag = 'input window, operand 0, single buffered']
    #allocation3 [shape = 's32[1]{0}', space=sflag, size = 0x4, scoped, tag = 'scoped memory for tpu_custom_call.1']
    #allocation4 [shape = 's32[1]{0}', space=sflag, size = 0x4, scoped, tag = 'scoped memory for tpu_custom_call.1']
    #allocation5 [shape = 'u8[1024]{0}', space=vmem, size = 0x400, scoped, tag = 'output window, operand 0, single buffered']
    %6 = vsyncpa [#allocation3], 0
    %7 = vsyncpa [#allocation4], 0
    // Predicated region
    $region2: #{tpu_custom_call.1} parent=1 // pred_check
      _
    $region3: #{tpu_custom_call.1} parent=1 // pred_check_branch
      %9 = sbr.rel (0) target = $region5
    $region4: #{tpu_custom_call.1} parent=1 // pred_region
      %s11 = ssub.s32 32, 32
      %12 = vsyncadd [#allocation3], %s11
      %s14 = sshll.u32 [#allocation2], 4
      %s15 = int_to_ptr.vmem [resolvable:$true] %s14
      %17 = dma.hbm_to_vmem [thread:$0]  %s0, 32, %s15, [#allocation3]
    $region5: #{tpu_custom_call.1} parent=1 // pred_fallthru
      _
    // Predicated region
    $region6: #{tpu_custom_call.1} parent=1 // pred_check
      _
    $region7: #{tpu_custom_call.1} parent=1 // pred_check_branch
      %19 = sbr.rel (0) target = $region9
    $region8: #{tpu_custom_call.1} parent=1 // pred_region
      %20 = dma.done [#allocation3], 32
    $region9: #{tpu_custom_call.1} parent=1 // pred_fallthru
      _
    %v21 = vld [vmem:[#allocation2] sm:$0x3]
    %v22 = vmul.f32 %v21, 0.2
    %v23 = vtanh.pop %v22
    %v24 = vmul.f32 %v23, 2.5
    %25 = vst [vmem:[#allocation5] sm:$0x3] %v24
    // Predicated region
    $region10: #{tpu_custom_call.1} parent=1 // pred_check
      _
    $region11: #{tpu_custom_call.1} parent=1 // pred_check_branch
      %27 = sbr.rel (0) target = $region13
    $region12: #{tpu_custom_call.1} parent=1 // pred_region
      %s29 = ssub.s32 32, 32
      %30 = vsyncadd [#allocation4], %s29
      %s32 = sshll.u32 [#allocation5], 4
      %s33 = int_to_ptr.vmem [resolvable:$true] %s32
      %35 = dma.vmem_to_hbm [thread:$0]  %s33, 32, %s1, [#allocation4]
    $region13: #{tpu_custom_call.1} parent=1 // pred_fallthru
      _
    // Predicated region
    $region14: #{tpu_custom_call.1} parent=1 // pred_check
      _
    $region15: #{tpu_custom_call.1} parent=1 // pred_check_branch
      %37 = sbr.rel (0) target = $region17
    $region16: #{tpu_custom_call.1} parent=1 // pred_region
      %38 = dma.done [#allocation4], 32
    $region17: #{tpu_custom_call.1} parent=1 // pred_fallthru
      _
    %39 = vsyncpa [#allocation3], 1
    %40 = vsyncpa [#allocation4], 1

</llo_original>
